<compile_context>
chip_gen: v7x
topology: tpu7x:2x2x1
jax: 0.10.0
libtpu: 0.0.40
codegen_flags: <defaults>
</compile_context>

<pallas_src>
import jax
import jax.numpy as jnp
from jax.experimental import pallas as pl
from jax.experimental.pallas import tpu as pltpu


def _attention_kernel(ctx_ref, h_ref, w_ref, out_ref):
    """score -> softmax over S -> weighted sum over S, for one batch tile."""
    ctx = ctx_ref[...].astype(jnp.float32)            # (TB, S, H)
    h = h_ref[...].astype(jnp.float32)                # (TB, H)
    w = w_ref[...].astype(jnp.float32)                # (2, H)
    wc = w[0:1, :]                                    # (1, H) context half
    wh = w[1:2, :]                                    # (1, H) hidden  half

    # score[b, s] = <ctx[b, s, :], wc> + <h[b, :], wh>   (== combined @ attention)
    ctx_score = jnp.sum(ctx * wc[None, :, :], axis=-1)        # (TB, S)
    h_score = jnp.sum(h * wh, axis=-1, keepdims=True)         # (TB, 1)
    score = ctx_score + h_score                                # (TB, S)

    # softmax over the sequence axis (subtract max before exp for stability).
    score = score - jnp.max(score, axis=1, keepdims=True)
    e = jnp.exp(score)
    denom = jnp.sum(e, axis=1, keepdims=True)
    attn = e * pl.reciprocal(denom, approx=True)               # (TB, S)

    # feature[b, :] = sum_s attn[b, s] * ctx[b, s, :]  — VPU mult + sublane reduce
    feature = jnp.sum(attn[:, :, None] * ctx, axis=1)          # (TB, H)
    out_ref[...] = feature.astype(out_ref.dtype)


def _vmem_capacity_bytes():
    """Physical VMEM of the attached TPU; conservative fallback = v7x (64 MiB)."""
    try:
        cap = getattr(pltpu.get_tpu_info(), "vmem_capacity_bytes", None)
        if cap:
            return int(cap)
    except Exception:
        pass
    return 64 * 1024 * 1024


def _tile_vmem_bytes(tb, S, H, in_itemsize):
    """Rough VMEM footprint of one grid step (double-buffered I/O + f32 temps)."""
    ctx_in = 2 * tb * S * H * in_itemsize        # double-buffered context tile
    h_in = 2 * tb * H * in_itemsize              # double-buffered h tile
    out = 2 * tb * H * 4                         # double-buffered output tile
    w = 2 * H * 4                                # resident attention vector
    work = 2 * tb * S * H * 4 + 4 * tb * S * 4   # f32 upcast + weighted product + scores
    return ctx_in + h_in + out + w + work


def _pick_batch_tile(B, S, H, in_itemsize, budget_bytes):
    if B <= 8:
        return B
    tb = (min(B, 1024) // 8) * 8
    while tb > 8 and _tile_vmem_bytes(tb, S, H, in_itemsize) > budget_bytes:
        tb -= 8
    return max(tb, 8)


def attention_forward(context, h, attn_w, *, batch_tile=None):
    """Mirrors Attention.forward.

    context: (B, S, H) encoder states
    h:       (B, H)    query hidden state
    attn_w:  (2H, 1)   attention parameter (torch layout)
    returns: feature (B, H) in context.dtype
    """
    B, S, H = context.shape
    assert h.shape == (B, H)
    assert attn_w.shape == (2 * H, 1)

    # (2H, 1) torch layout -> (2, H): row 0 = context half, row 1 = hidden half.
    w = attn_w.reshape(2, H).astype(jnp.float32)

    in_itemsize = jnp.dtype(context.dtype).itemsize
    vmem_cap = _vmem_capacity_bytes()

    if batch_tile is None:
        tb = _pick_batch_tile(B, S, H, in_itemsize, budget_bytes=vmem_cap // 2)
    else:
        tb = min(batch_tile, B)
        assert tb == B or tb % 8 == 0, "batch_tile must be a multiple of 8 (or == B)"
    grid = (pl.cdiv(B, tb),)
    # TODO(synk): for very long sequences where one (tb, S, H) tile no longer fits
    # in VMEM even at tb=8, add a second grid axis over S with an online-softmax
    # accumulator (running max / denom / feature scratch, init/finalize via pl.when).

    vmem_limit = int(min(0.85 * vmem_cap,
                         max(2 * _tile_vmem_bytes(tb, S, H, in_itemsize),
                             32 * 1024 * 1024)))

    return pl.pallas_call(
        _attention_kernel,
        out_shape=jax.ShapeDtypeStruct((B, H), context.dtype),
        grid=grid,
        in_specs=[
            pl.BlockSpec((tb, S, H), lambda i: (i, 0, 0)),   # context tile
            pl.BlockSpec((tb, H), lambda i: (i, 0)),         # h tile
            pl.BlockSpec((2, H), lambda i: (0, 0)),          # attention vector (resident)
        ],
        out_specs=pl.BlockSpec((tb, H), lambda i: (i, 0)),
        compiler_params=pltpu.CompilerParams(
            dimension_semantics=("parallel",),
            vmem_limit_bytes=vmem_limit,
        ),
    )(context, h, w)


def _reference_attention(context, h, attn_w):
    """Pure-JAX reference of Attention.forward for correctness checks."""
    B, S, H = context.shape
    h_rep = jnp.repeat(h[:, None, :], S, axis=1)                   # (B, S, H)
    combined = jnp.concatenate([context, h_rep], axis=-1)          # (B, S, 2H)
    score = (combined @ attn_w)[..., 0]                            # (B, S)
    attn = jax.nn.softmax(score, axis=1)[..., None]                # (B, S, 1)
    return jnp.sum(context * attn, axis=1)                         # (B, H)


def _init_attention_param(key, hidden_dim):
    """xavier_normal_ init of the (2H, 1) attention parameter."""
    std = (2.0 / (2 * hidden_dim + 1)) ** 0.5
    return jax.random.normal(key, (2 * hidden_dim, 1), jnp.float32) * std


if __name__ == "__main__":
    key = jax.random.PRNGKey(0)

    def run_case(B, S, H, case_key, batch_tile=None):
        k_ctx, k_h, k_w = jax.random.split(case_key, 3)
        context = jax.random.normal(k_ctx, (B, S, H), jnp.float32)
        h = jax.random.normal(k_h, (B, H), jnp.float32)
        attn_w = _init_attention_param(k_w, H)

        out = attention_forward(context, h, attn_w, batch_tile=batch_tile)
        jax.block_until_ready(out)

        ref = _reference_attention(context, h, attn_w)
        assert out.shape == (B, H)
        err = jnp.max(jnp.abs(out - ref))
        assert jnp.allclose(out, ref, atol=2e-3, rtol=2e-3), (
            f"mismatch at B={B}, S={S}, H={H}: max|err|={err}")

    k1, k2, k3 = jax.random.split(key, 3)
    # Module-suggested small shapes (ragged S/H handled in-layout, no padding pass).
    run_case(2, 8, 32, k1)
    # Tile-aligned, lane-dense path (B multiple of 8, H multiple of 128).
    run_case(8, 16, 128, k2)
    # Multi-step batch grid (3 pipelined steps across the batch axis).
    run_case(24, 16, 64, k3, batch_tile=8)

    print("KERNEL_OK")
</pallas_src>

<mosaic_0001>
module attributes {stable_mosaic.version = 11 : i64} {
  func.func @_attention_kernel(%arg0: i32, %arg1: memref<2x8x32xf32, #tpu.memory_space<vmem>>, %arg2: memref<2x32xf32, #tpu.memory_space<vmem>>, %arg3: memref<2x32xf32, #tpu.memory_space<vmem>>, %arg4: memref<2x32xf32, #tpu.memory_space<vmem>>) attributes {dimension_semantics = [#tpu.dimension_semantics<parallel>], iteration_bounds = array<i64: 1>, scalar_prefetch = 0 : i64, scratch_operands = 0 : i64, tpu.core_type = #tpu.core_type<tc>, window_params = [{transform_indices = @transform_0, window_bounds = array<i64: 2, 8, 32>}, {transform_indices = @transform_1, window_bounds = array<i64: 2, 32>}, {pipeline_mode = #tpu.pipeline_mode<synchronous>, transform_indices = @transform_2, window_bounds = array<i64: 2, 32>}, {transform_indices = @transform_3, window_bounds = array<i64: 2, 32>}]} {
    %c0 = arith.constant 0 : index
    %c0_0 = arith.constant 0 : index
    %c0_1 = arith.constant 0 : index
    %0 = vector.load %arg1[%c0, %c0_0, %c0_1] : memref<2x8x32xf32, #tpu.memory_space<vmem>>, vector<2x8x32xf32>
    %c0_2 = arith.constant 0 : index
    %c0_3 = arith.constant 0 : index
    %1 = vector.load %arg2[%c0_2, %c0_3] : memref<2x32xf32, #tpu.memory_space<vmem>>, vector<2x32xf32>
    %c0_4 = arith.constant 0 : index
    %c0_5 = arith.constant 0 : index
    %2 = vector.load %arg3[%c0_4, %c0_5] : memref<2x32xf32, #tpu.memory_space<vmem>>, vector<2x32xf32>
    %3 = vector.extract_strided_slice %2 {offsets = [0, 0], sizes = [1, 32], strides = [1, 1]} : vector<2x32xf32> to vector<1x32xf32>
    %4 = vector.extract_strided_slice %2 {offsets = [1, 0], sizes = [1, 32], strides = [1, 1]} : vector<2x32xf32> to vector<1x32xf32>
    %5 = vector.shape_cast %3 : vector<1x32xf32> to vector<1x1x32xf32>
    %6 = vector.broadcast %5 : vector<1x1x32xf32> to vector<2x8x32xf32>
    %7 = arith.mulf %0, %6 : vector<2x8x32xf32>
    %cst = arith.constant dense<0.000000e+00> : vector<2x8xf32>
    %8 = vector.multi_reduction <add>, %7, %cst [2] : vector<2x8x32xf32> to vector<2x8xf32>
    %9 = vector.broadcast %4 : vector<1x32xf32> to vector<2x32xf32>
    %10 = arith.mulf %1, %9 : vector<2x32xf32>
    %cst_6 = arith.constant dense<0.000000e+00> : vector<2xf32>
    %11 = vector.multi_reduction <add>, %10, %cst_6 [1] : vector<2x32xf32> to vector<2xf32>
    %12 = vector.shape_cast %11 : vector<2xf32> to vector<2x1xf32>
    %13 = vector.broadcast %12 : vector<2x1xf32> to vector<2x8xf32>
    %14 = arith.addf %8, %13 : vector<2x8xf32>
    %cst_7 = arith.constant dense<0xFF800000> : vector<2xf32>
    %15 = vector.multi_reduction <maximumf>, %14, %cst_7 [1] : vector<2x8xf32> to vector<2xf32>
    %16 = vector.shape_cast %15 : vector<2xf32> to vector<2x1xf32>
    %17 = vector.broadcast %16 : vector<2x1xf32> to vector<2x8xf32>
    %18 = arith.subf %14, %17 : vector<2x8xf32>
    %19 = math.exp %18 : vector<2x8xf32>
    %cst_8 = arith.constant dense<0.000000e+00> : vector<2xf32>
    %20 = vector.multi_reduction <add>, %19, %cst_8 [1] : vector<2x8xf32> to vector<2xf32>
    %21 = vector.shape_cast %20 : vector<2xf32> to vector<2x1xf32>
    %22 = tpu.reciprocal %21 {approx = true} : vector<2x1xf32> -> vector<2x1xf32>
    %23 = vector.broadcast %22 : vector<2x1xf32> to vector<2x8xf32>
    %24 = arith.mulf %19, %23 : vector<2x8xf32>
    %25 = vector.shape_cast %24 : vector<2x8xf32> to vector<2x8x1xf32>
    %26 = vector.broadcast %25 : vector<2x8x1xf32> to vector<2x8x32xf32>
    %27 = arith.mulf %26, %0 : vector<2x8x32xf32>
    %cst_9 = arith.constant dense<0.000000e+00> : vector<2x32xf32>
    %28 = vector.multi_reduction <add>, %27, %cst_9 [1] : vector<2x8x32xf32> to vector<2x32xf32>
    %c0_10 = arith.constant 0 : index
    %c0_11 = arith.constant 0 : index
    %29 = vector.load %arg4[%c0_10, %c0_11] : memref<2x32xf32, #tpu.memory_space<vmem>>, vector<2x32xf32>
    tpu.vector_store %arg4[%c0_10, %c0_11], %28 {strides = array<i32>} : memref<2x32xf32, #tpu.memory_space<vmem>>, vector<2x32xf32>,
    return
  }
  func.func @transform_0(%arg0: i32) -> (i32, i32, i32) {
    %c0_i32 = arith.constant 0 : i32
    %c0_i32_0 = arith.constant 0 : i32
    %c0_i32_1 = arith.constant 0 : i32
    return %arg0, %c0_i32, %c0_i32_0 : i32, i32, i32
  }
  func.func @transform_1(%arg0: i32) -> (i32, i32) {
    %c0_i32 = arith.constant 0 : i32
    %c0_i32_0 = arith.constant 0 : i32
    return %arg0, %c0_i32 : i32, i32
  }
  func.func @transform_2(%arg0: i32) -> (i32, i32) {
    %c0_i32 = arith.constant 0 : i32
    %c0_i32_0 = arith.constant 0 : i32
    %c0_i32_1 = arith.constant 0 : i32
    return %c0_i32, %c0_i32_0 : i32, i32
  }
  func.func @transform_3(%arg0: i32) -> (i32, i32) {
    %c0_i32 = arith.constant 0 : i32
    %c0_i32_0 = arith.constant 0 : i32
    return %arg0, %c0_i32 : i32, i32
  }
}

</mosaic_0001>

<llo_original>
// kernel: tpu_custom_call.1
$region0: #{tpu_custom_call.1}
  #allocation0 [shape = 'u32[]', space=smem, size = 0x4, offset = 0x4, fixed_abs, tag = 'smem constant byte address 0x4 - core index']
  #allocation1 [shape = 'u32[144,128]{1,0:T(1,128)}', space=vmem, size = 0x12000, scoped, tag = 'internal scratch']
  %s0 = inlined_call_operand.hbm [shape: f32[2,8,32], index: 0, kind: input, shape index: {}]
  %s1 = inlined_call_operand.vmem [shape: f32[2,32], index: 1, kind: input, shape index: {}]
  %s2 = inlined_call_operand.vmem [shape: f32[2,32], index: 2, kind: input, shape index: {}]
  %s3 = inlined_call_operand.hbm [shape: f32[2,32], index: 3, kind: output, shape index: {}]
  %s4 = sld [smem:[#allocation0]]
  $region26: #{tpu_custom_call.1} parent=0
    _
  %s6 = ssub.s32 1, %s4
  %s7 = scalar_select 0, %s6, %s4
  $region1: #{tpu_custom_call.1} parent=0
    #allocation2 [shape = 'u8[8192]{0}', space=vmem, size = 0x2000, scoped, tag = 'input window, operand 0, single buffered']
    #allocation3 [shape = 's32[1]{0}', space=sflag, size = 0x4, scoped, tag = 'scoped memory for tpu_custom_call.1']
    #allocation4 [shape = 's32[1]{0}', space=sflag, size = 0x4, scoped, tag = 'scoped memory for tpu_custom_call.1']
    #allocation5 [shape = 'u8[1024]{0}', space=vmem, size = 0x400, scoped, tag = 'output window, operand 0, single buffered']
    %8 = vsyncpa [#allocation3], 0
    %9 = vsyncpa [#allocation4], 0
    // Predicated region
    $region2: #{tpu_custom_call.1} parent=1 // pred_check
      _
    $region3: #{tpu_custom_call.1} parent=1 // pred_check_branch
      %11 = sbr.rel (0) target = $region5
    $region4: #{tpu_custom_call.1} parent=1 // pred_region
      %s13 = ssub.s32 256, 256
      %14 = vsyncadd [#allocation3], %s13
      %s15 = sshll.u32 [#allocation2], 4
      %s16 = int_to_ptr.vmem [resolvable:$true] %s15
      %21 = dma.hbm_to_vmem [thread:$0]  %s0, 256, %s16, [#allocation3], 128, 128, 8
    $region5: #{tpu_custom_call.1} parent=1 // pred_fallthru
      _
    // Predicated region
    $region6: #{tpu_custom_call.1} parent=1 // pred_check
      _
    $region7: #{tpu_custom_call.1} parent=1 // pred_check_branch
      %23 = sbr.rel (0) target = $region9
    $region8: #{tpu_custom_call.1} parent=1 // pred_region
      _
    $region9: #{tpu_custom_call.1} parent=1 // pred_fallthru
      _
    // Predicated region
    $region10: #{tpu_custom_call.1} parent=1 // pred_check
      _
    $region11: #{tpu_custom_call.1} parent=1 // pred_check_branch
      %25 = sbr.rel (0) target = $region13
    $region12: #{tpu_custom_call.1} parent=1 // pred_region
      _
    $region13: #{tpu_custom_call.1} parent=1 // pred_fallthru
      _
    // Predicated region
    $region14: #{tpu_custom_call.1} parent=1 // pred_check
      _
    $region15: #{tpu_custom_call.1} parent=1 // pred_check_branch
      %27 = sbr.rel (0) target = $region17
    $region16: #{tpu_custom_call.1} parent=1 // pred_region
      %28 = dma.done [#allocation3], 256
    $region17: #{tpu_custom_call.1} parent=1 // pred_fallthru
      _
    %v29 = vld [vmem:[#allocation2] sm:$0xff]
    %v30 = vld [vmem:[#allocation2 + $0x8] sm:$0xff]
    %v31 = vld [vmem:[%s1] sm:$0x3]
    %v32 = vld [vmem:[%s2] sm:$0x3]
    %v33 = vlaneseq
    %v34 = vshrl.u32 %v33, 7
    %v35 = vsub.s32 0, %v34
    %v36 = vrot.slane %v32, %v35
    %v37 = vmul.f32 %v29, %v36
    %v38 = vmul.f32 %v30, %v36
    %vm39 = vcmask 261120
    %v40 = vsel %vm39, %v37, 0.0
    %41 = vadd.xlane.f32.xlu0 %v40
    %v42 = vpop.xlane.xlu0 %41
    %v43 = vsel %vm39, %v38, 0.0
    %44 = vadd.xlane.f32.xlu0 %v43
    %v45 = vpop.xlane.xlu0 %44
    %v46 = vlaneseq
    %v47 = vshrl.u32 %v46, 7
    %v48 = vsub.s32 1, %v47
    %v49 = vrot.slane %v32, %v48
    %v50 = vmul.f32 %v31, %v49
    %vm51 = vcmask 254976
    %v52 = vsel %vm51, %v50, 0.0
    %53 = vadd.xlane.f32.xlu0 %v52
    %v54 = vpop.xlane.xlu0 %53
    %v56 = vlaneseq
    %v57 = vshrl.u32 %v56, 7
    %v58 = vsub.s32 0, %v57
    %v59 = vrot.slane %v54, %v58
    %v60 = vlaneseq
    %v61 = vshrl.u32 %v60, 7
    %v62 = vsub.s32 1, %v61
    %v63 = vrot.slane %v54, %v62
    %v66 = vadd.f32 %v42, %v59
    %v67 = vadd.f32 %v45, %v63
    %70 = vset.pattern.permute.xlu0 0
    %71 = vperm.xlu0 %70, %v66
    %v72 = vpop.permute.xlu0 %71
    %73 = vset.pattern.permute.xlu0 0
    %74 = vperm.xlu0 %73, %v67
    %v75 = vpop.permute.xlu0 %74
    %v76 = vlaneseq
    %v77 = vand.u32 %v76, 127
    %v78 = vlaneseq
    %v79 = vshrl.u32 %v78, 7
    %v80 = vsub.s32 %v77, %v79
    %v81 = vrot.slane %v72, %v80
    %v82 = vlaneseq
    %v83 = vshrl.u32 %v82, 7
    %v84 = vsub.s32 %v77, %v83
    %v85 = vrot.slane %v75, %v84
    %vm86 = vcmask 1041409
    %v87 = vsel %vm86, %v85, %v81
    %vm89 = vcmask 58368
    %v90 = vsel %vm89, %v87, -inf
    %91 = vmax.xlane.f32.xlu0 %v90
    %v92 = vpop.xlane.xlu0 %91
    %v94 = vlaneseq
    %v95 = vshrl.u32 %v94, 7
    %v96 = vsub.s32 0, %v95
    %v97 = vrot.slane %v92, %v96
    %v98 = vlaneseq
    %v99 = vshrl.u32 %v98, 7
    %v100 = vsub.s32 1, %v99
    %v101 = vrot.slane %v92, %v100
    %v104 = vsub.f32 %v66, %v97
    %v105 = vsub.f32 %v67, %v101
    %v106 = vmul.f32 %v104, 1.442695
    %v107 = vpow.pop %v106
    %v108 = vmul.f32 %v105, 1.442695
    %v109 = vpow.pop %v108
    %112 = vset.pattern.permute.xlu0 0
    %113 = vperm.xlu0 %112, %v107
    %v114 = vpop.permute.xlu0 %113
    %115 = vset.pattern.permute.xlu0 0
    %116 = vperm.xlu0 %115, %v109
    %v117 = vpop.permute.xlu0 %116
    %v118 = vlaneseq
    %v119 = vshrl.u32 %v118, 7
    %v120 = vsub.s32 %v77, %v119
    %v121 = vrot.slane %v114, %v120
    %v122 = vlaneseq
    %v123 = vshrl.u32 %v122, 7
    %v124 = vsub.s32 %v77, %v123
    %v125 = vrot.slane %v117, %v124
    %v126 = vsel %vm86, %v125, %v121
    %v128 = vsel %vm89, %v126, 0.0
    %129 = vadd.xlane.f32.xlu0 %v128
    %v130 = vpop.xlane.xlu0 %129
    %v131 = vrcp.pop %v130
    %v133 = vlaneseq
    %v134 = vshrl.u32 %v133, 7
    %v135 = vsub.s32 0, %v134
    %v136 = vrot.slane %v131, %v135
    %v137 = vlaneseq
    %v138 = vshrl.u32 %v137, 7
    %v139 = vsub.s32 1, %v138
    %v140 = vrot.slane %v131, %v139
    %v143 = vmul.f32 %v107, %v136
    %v144 = vmul.f32 %v109, %v140
    %146 = vset.pattern.permute.xlu0 0
    %147 = vperm.xlu0 %146, %v143
    %v148 = vpop.permute.xlu0 %147
    %151 = vset.pattern.permute.xlu0 0
    %152 = vperm.xlu0 %151, %v144
    %v153 = vpop.permute.xlu0 %152
    %v155 = vmul.f32 %v148, %v29
    %v156 = vmul.f32 %v153, %v30
    %v157 = vsel %vm39, %v155, 0.0
    %v158 = vrot.slane %v157, 4
    %v159 = vadd.f32 %v157, %v158
    %v160 = vrot.slane %v159, 2
    %v161 = vadd.f32 %v159, %v160
    %v162 = vrot.slane %v161, 1
    %v163 = vadd.f32 %v161, %v162
    %v164 = vsel %vm39, %v156, 0.0
    %v165 = vrot.slane %v164, 4
    %v166 = vadd.f32 %v164, %v165
    %v167 = vrot.slane %v166, 2
    %v168 = vadd.f32 %v166, %v167
    %v169 = vrot.slane %v168, 1
    %v170 = vadd.f32 %v168, %v169
    %v173 = vsel %vm86, %v170, %v163
    %175 = vst.msk [vmem:[#allocation5] sm:$0x3] %vm51, %v173
    // Predicated region
    $region18: #{tpu_custom_call.1} parent=1 // pred_check
      _
    $region19: #{tpu_custom_call.1} parent=1 // pred_check_branch
      %177 = sbr.rel (0) target = $region21
    $region20: #{tpu_custom_call.1} parent=1 // pred_region
      %s179 = ssub.s32 32, 32
      %180 = vsyncadd [#allocation4], %s179
      %s182 = sshll.u32 [#allocation5], 4
      %s183 = int_to_ptr.vmem [resolvable:$true] %s182
      %185 = dma.vmem_to_hbm [thread:$0]  %s183, 32, %s3, [#allocation4]
    $region21: #{tpu_custom_call.1} parent=1 // pred_fallthru
      _
    // Predicated region
    $region22: #{tpu_custom_call.1} parent=1 // pred_check
      _
    $region23: #{tpu_custom_call.1} parent=1 // pred_check_branch
      %187 = sbr.rel (0) target = $region25
    $region24: #{tpu_custom_call.1} parent=1 // pred_region
      %188 = dma.done [#allocation4], 32
    $region25: #{tpu_custom_call.1} parent=1 // pred_fallthru
      _
    %189 = vsyncpa [#allocation3], 1
    %190 = vsyncpa [#allocation4], 1

</llo_original>
